<compile_context>
chip_gen: v5e
topology: v5e:2x2
jax: 0.10.0
libtpu: 0.0.40
codegen_flags: <defaults>
</compile_context>

<pallas_src>
import jax
import jax.numpy as jnp
from jax.experimental import pallas as pl
from jax.experimental.pallas import tpu as pltpu


# ----------------------------------------------------------------------------
# Fused kernel: a chain of (Linear + Tanh) layers, all activations in VMEM.
# ----------------------------------------------------------------------------
def _make_fused_extractor_kernel(layer_out_dims):
    num_layers = len(layer_out_dims)

    def kernel(x_ref, *refs):
        # refs = (w0, ..., w_{L-1}, bias_ref, out_ref)
        bias_ref = refs[num_layers]
        out_ref = refs[num_layers + 1]
        h = x_ref[...]
        for layer, out_dim in enumerate(layer_out_dims):
            w = refs[layer][...]                          # (in, out), compute dtype (bf16/f32)
            b = bias_ref[layer:layer + 1, :out_dim]       # (1, out) f32, static slice
            # MXU matmul in the weights' dtype, f32 accumulation.
            acc = jnp.dot(h.astype(w.dtype), w, preferred_element_type=jnp.float32)
            # Tanh in f32 (portable to v5e; EUP slot overlaps with MXU/DMA).
            h = jnp.tanh(acc + b)
        out_ref[...] = h.astype(out_ref.dtype)

    return kernel


def _round_up(x: int, m: int) -> int:
    return ((x + m - 1) // m) * m


def _choose_tile_b(batch: int, requested: int) -> int:
    """Batch tile: big (amortize ~0.35us/step), multiple of 16 (bf16 sublane
    packing) when possible, and capped so grid >= 2 when the batch can split
    (keeps v7x's second TensorCore busy; negligible cost on v5e/v6e)."""
    m = 16 if batch >= 16 else 8
    tile = max(m, min(requested, _round_up(batch, m)))
    if batch > 2 * m:
        tile = min(tile, _round_up(pl.cdiv(batch, 2), m))
    return tile


# ----------------------------------------------------------------------------
# One-time parameter preparation (hoisted OUT of the per-forward hot path).
# ----------------------------------------------------------------------------
def _fuse_heads(w_pi, b_pi, w_vf, b_vf):
    """Combine pi and vf head parameters so both heads run as one matmul per
    layer, producing a lane-dense concatenated (pi | vf) output.

    Layer 0:   W = [Wp | Wv]          (concat along output dim)
    Layer k>0: W = [[Wp, 0],[0, Wv]]  (block-diagonal)
    """
    # TODO(synk): heads with differing depths/widths would need zero-padding of
    # the shorter head; the realized config has identical pi/vf architectures.
    assert len(w_pi) == len(w_vf) and len(w_pi) > 0

    fused_w = [jnp.concatenate([w_pi[0], w_vf[0]], axis=1)]
    fused_b = [jnp.concatenate([b_pi[0], b_vf[0]], axis=1)]
    for wp, wv, bp, bv in zip(w_pi[1:], w_vf[1:], b_pi[1:], b_vf[1:]):
        in_p, out_p = wp.shape
        in_v, out_v = wv.shape
        top = jnp.concatenate([wp, jnp.zeros((in_p, out_v), wp.dtype)], axis=1)
        bot = jnp.concatenate([jnp.zeros((in_v, out_p), wv.dtype), wv], axis=1)
        fused_w.append(jnp.concatenate([top, bot], axis=0))
        fused_b.append(jnp.concatenate([bp, bv], axis=1))
    return fused_w, fused_b


def prepare_fused_params(params, *, compute_dtype=jnp.bfloat16):
    """Precompute fused weights (cast to the matmul compute dtype) and a single
    lane-padded packed bias array. Call once at parameter-build time."""
    w_s, b_s = params["shared"]
    w_p, b_p = params["pi"]
    w_v, b_v = params["vf"]

    head_w, head_b = _fuse_heads(w_p, b_p, w_v, b_v)
    all_w = list(w_s) + head_w
    all_b = list(b_s) + head_b

    layer_out_dims = tuple(int(w.shape[1]) for w in all_w)
    max_out = max(layer_out_dims)

    # Pack all biases into one (num_layers, max_out) f32 array (one DMA).
    bias = jnp.zeros((len(all_b), max_out), jnp.float32)
    for i, b in enumerate(all_b):
        bias = bias.at[i, : int(b.shape[-1])].set(
            jnp.reshape(b, (-1,)).astype(jnp.float32))

    return {
        "weights": tuple(jnp.asarray(w, compute_dtype) for w in all_w),
        "bias": bias,
        "layer_out_dims": layer_out_dims,
        "in_dim": int(all_w[0].shape[0]),
        "pi_dim": int(w_p[-1].shape[1]),
        "vf_dim": int(w_v[-1].shape[1]),
    }


# ----------------------------------------------------------------------------
# Forward pass.
# ----------------------------------------------------------------------------
def mlp_extractor_forward_fused(features, fused_params, *, tile_b: int = 2048):
    """Returns the lane-dense (B, pi_dim + vf_dim) latent slab.
    Prefer consuming this slab downstream; it preserves the 128-lane layout.
    Pass bf16 features to also halve the feature/output HBM traffic."""
    weights = fused_params["weights"]
    bias = fused_params["bias"]
    layer_out_dims = fused_params["layer_out_dims"]

    B, d_in = features.shape
    assert d_in == fused_params["in_dim"]
    out_dim = layer_out_dims[-1]
    out_dtype = features.dtype

    tile_b = _choose_tile_b(B, tile_b)
    grid = (pl.cdiv(B, tile_b),)

    in_specs = [pl.BlockSpec((tile_b, d_in), lambda i: (i, 0))]
    args = [features]
    for w in weights:
        # Tiny weights: full-array blocks with constant block index -> fetched
        # once, VMEM-resident across all grid steps.
        in_specs.append(pl.BlockSpec(w.shape, lambda i: (0, 0)))
        args.append(w)
    in_specs.append(pl.BlockSpec(bias.shape, lambda i: (0, 0)))
    args.append(bias)

    out_specs = pl.BlockSpec((tile_b, out_dim), lambda i: (i, 0))

    # Advisory, dtype-aware cost estimate so XLA can overlap this small kernel.
    flops = 2 * B * sum(int(w.shape[0]) * int(w.shape[1]) for w in weights)
    transcendentals = B * sum(layer_out_dims)
    bytes_accessed = int(
        B * d_in * features.dtype.itemsize
        + B * out_dim * jnp.dtype(out_dtype).itemsize
        + sum(int(w.size) * w.dtype.itemsize for w in weights)
        + int(bias.size) * bias.dtype.itemsize
    )

    return pl.pallas_call(
        _make_fused_extractor_kernel(layer_out_dims),
        out_shape=jax.ShapeDtypeStruct((B, out_dim), out_dtype),
        grid_spec=pltpu.PrefetchScalarGridSpec(
            num_scalar_prefetch=0,
            grid=grid,
            in_specs=in_specs,
            out_specs=out_specs,
        ),
        compiler_params=pltpu.CompilerParams(
            dimension_semantics=("parallel",),
        ),
        cost_estimate=pl.CostEstimate(
            flops=flops,
            transcendentals=transcendentals,
            bytes_accessed=bytes_accessed,
        ),
    )(*args)


def mlp_extractor_forward(features, fused_params, **kwargs):
    """API-parity wrapper matching MlpExtractor.forward (create_cvf=False).
    Note: this materializes two sub-128-lane slices; downstream code that can
    consume the fused slab should use mlp_extractor_forward_fused directly."""
    slab = mlp_extractor_forward_fused(features, fused_params, **kwargs)
    pi_dim = fused_params["pi_dim"]
    return slab[:, :pi_dim], slab[:, pi_dim:]


# ----------------------------------------------------------------------------
# MlpExtractor parameter construction (deterministic, synthetic).
# ----------------------------------------------------------------------------
def init_linear(key, in_dim, out_dim):
    """Deterministic init mimicking nn.Linear default (uniform +/- 1/sqrt(in))."""
    kw, kb = jax.random.split(key)
    bound = 1.0 / jnp.sqrt(jnp.float32(in_dim))
    # Stored as (in, out): equivalent to PyTorch weight (out, in) transposed.
    w = jax.random.uniform(kw, (in_dim, out_dim), jnp.float32, -bound, bound)
    b = jax.random.uniform(kb, (1, out_dim), jnp.float32, -bound, bound)
    return w, b


def build_mlp_extractor_params(key, feature_dim, shared_dims, pi_dims, vf_dims):
    params = {"shared": ([], []), "pi": ([], []), "vf": ([], [])}

    def build_chain(key, in_dim, dims, name):
        ws, bs = [], []
        for d in dims:
            key, sub = jax.random.split(key)
            w, b = init_linear(sub, in_dim, d)
            ws.append(w)
            bs.append(b)
            in_dim = d
        params[name] = (ws, bs)
        return key, in_dim

    key, last_shared = build_chain(key, feature_dim, shared_dims, "shared")
    key, _ = build_chain(key, last_shared, pi_dims, "pi")
    key, _ = build_chain(key, last_shared, vf_dims, "vf")
    return params


# ----------------------------------------------------------------------------
# Pure-JAX reference for correctness checking.
# ----------------------------------------------------------------------------
def mlp_ref(x, weights, biases):
    h = x
    for w, b in zip(weights, biases):
        h = jnp.tanh(h @ w + b)
    return h


if __name__ == "__main__":
    # Shapes consistent with the module's forward.
    feature_dim = 32
    shared_dims = [64]          # net_arch int entries
    pi_dims = [64, 64]          # net_arch[-1]["pi"]
    vf_dims = [64, 64]          # net_arch[-1]["vf"]

    key = jax.random.PRNGKey(0)
    key, pkey, xkey_small, xkey_big = jax.random.split(key, 4)

    params = build_mlp_extractor_params(
        pkey, feature_dim, shared_dims, pi_dims, vf_dims
    )

    # One-time (hoisted) fused-parameter preparation.
    fused_f32 = prepare_fused_params(params, compute_dtype=jnp.float32)   # exactness check
    fused_bf16 = prepare_fused_params(params, compute_dtype=jnp.bfloat16)  # production default

    for batch, xk in ((8, xkey_small), (200, xkey_big)):
        features = jax.random.normal(xk, (batch, feature_dim), jnp.float32)

        shared_ref = mlp_ref(features, *params["shared"])
        pi_ref = mlp_ref(shared_ref, *params["pi"])
        vf_ref = mlp_ref(shared_ref, *params["vf"])

        # f32 compute path: exact structural check (multi-tile + partial tile at B=200).
        latent_pi, latent_vf = jax.block_until_ready(
            mlp_extractor_forward(features, fused_f32, tile_b=64)
        )
        assert latent_pi.shape == (batch, pi_dims[-1])
        assert latent_vf.shape == (batch, vf_dims[-1])
        assert jnp.allclose(latent_pi, pi_ref, atol=1e-5, rtol=1e-5)
        assert jnp.allclose(latent_vf, vf_ref, atol=1e-5, rtol=1e-5)

        # bf16 compute path (production default): lane-dense slab, relaxed tolerance.
        slab = jax.block_until_ready(
            mlp_extractor_forward_fused(features, fused_bf16)
        )
        assert slab.shape == (batch, pi_dims[-1] + vf_dims[-1])
        lp_b, lv_b = slab[:, : pi_dims[-1]], slab[:, pi_dims[-1]:]
        assert jnp.allclose(lp_b, pi_ref, atol=2e-2, rtol=2e-2)
        assert jnp.allclose(lv_b, vf_ref, atol=2e-2, rtol=2e-2)

    print("KERNEL_OK")
</pallas_src>

<mosaic_0001>
module attributes {stable_mosaic.version = 11 : i64} {
  func.func @kernel(%arg0: i32, %arg1: memref<8x32xf32, #tpu.memory_space<vmem>>, %arg2: memref<32x64xf32, #tpu.memory_space<vmem>>, %arg3: memref<64x128xf32, #tpu.memory_space<vmem>>, %arg4: memref<128x128xf32, #tpu.memory_space<vmem>>, %arg5: memref<3x128xf32, #tpu.memory_space<vmem>>, %arg6: memref<8x128xf32, #tpu.memory_space<vmem>>) attributes {dimension_semantics = [#tpu.dimension_semantics<parallel>], iteration_bounds = array<i64: 1>, scalar_prefetch = 0 : i64, scratch_operands = 0 : i64, tpu.core_type = #tpu.core_type<tc>, window_params = [{transform_indices = @transform_0, window_bounds = array<i64: 8, 32>}, {pipeline_mode = #tpu.pipeline_mode<synchronous>, transform_indices = @transform_1, window_bounds = array<i64: 32, 64>}, {pipeline_mode = #tpu.pipeline_mode<synchronous>, transform_indices = @transform_2, window_bounds = array<i64: 64, 128>}, {pipeline_mode = #tpu.pipeline_mode<synchronous>, transform_indices = @transform_3, window_bounds = array<i64: 128, 128>}, {pipeline_mode = #tpu.pipeline_mode<synchronous>, transform_indices = @transform_4, window_bounds = array<i64: 3, 128>}, {transform_indices = @transform_5, window_bounds = array<i64: 8, 128>}]} {
    %c0 = arith.constant 0 : index
    %c0_0 = arith.constant 0 : index
    %0 = vector.load %arg1[%c0, %c0_0] : memref<8x32xf32, #tpu.memory_space<vmem>>, vector<8x32xf32>
    %c0_1 = arith.constant 0 : index
    %c0_2 = arith.constant 0 : index
    %1 = vector.load %arg2[%c0_1, %c0_2] : memref<32x64xf32, #tpu.memory_space<vmem>>, vector<32x64xf32>
    %c0_3 = arith.constant 0 : index
    %c0_4 = arith.constant 0 : index
    %2 = vector.load %arg5[%c0_3, %c0_4] : memref<3x128xf32, #tpu.memory_space<vmem>>, vector<1x64xf32>
    %cst = arith.constant dense<0.000000e+00> : vector<8x64xf32>
    %3 = tpu.matmul %0, %1, %cst {dimension_numbers = #tpu.dot_dimension_numbers<[1], [0], [0], [1], [0, 0, 1, 1], [], []>} : vector<8x32xf32>, vector<32x64xf32>, vector<8x64xf32> -> vector<8x64xf32>
    %4 = vector.broadcast %2 : vector<1x64xf32> to vector<8x64xf32>
    %5 = arith.addf %3, %4 : vector<8x64xf32>
    %6 = math.tanh %5 : vector<8x64xf32>
    %c0_5 = arith.constant 0 : index
    %c0_6 = arith.constant 0 : index
    %7 = vector.load %arg3[%c0_5, %c0_6] : memref<64x128xf32, #tpu.memory_space<vmem>>, vector<64x128xf32>
    %c1 = arith.constant 1 : index
    %c0_7 = arith.constant 0 : index
    %8 = vector.load %arg5[%c1, %c0_7] : memref<3x128xf32, #tpu.memory_space<vmem>>, vector<1x128xf32>
    %cst_8 = arith.constant dense<0.000000e+00> : vector<8x128xf32>
    %9 = tpu.matmul %6, %7, %cst_8 {dimension_numbers = #tpu.dot_dimension_numbers<[1], [0], [0], [1], [0, 0, 1, 1], [], []>} : vector<8x64xf32>, vector<64x128xf32>, vector<8x128xf32> -> vector<8x128xf32>
    %10 = vector.broadcast %8 : vector<1x128xf32> to vector<8x128xf32>
    %11 = arith.addf %9, %10 : vector<8x128xf32>
    %12 = math.tanh %11 : vector<8x128xf32>
    %c0_9 = arith.constant 0 : index
    %c0_10 = arith.constant 0 : index
    %13 = vector.load %arg4[%c0_9, %c0_10] : memref<128x128xf32, #tpu.memory_space<vmem>>, vector<128x128xf32>
    %c2 = arith.constant 2 : index
    %c0_11 = arith.constant 0 : index
    %14 = vector.load %arg5[%c2, %c0_11] : memref<3x128xf32, #tpu.memory_space<vmem>>, vector<1x128xf32>
    %cst_12 = arith.constant dense<0.000000e+00> : vector<8x128xf32>
    %15 = tpu.matmul %12, %13, %cst_12 {dimension_numbers = #tpu.dot_dimension_numbers<[1], [0], [0], [1], [0, 0, 1, 1], [], []>} : vector<8x128xf32>, vector<128x128xf32>, vector<8x128xf32> -> vector<8x128xf32>
    %16 = vector.broadcast %14 : vector<1x128xf32> to vector<8x128xf32>
    %17 = arith.addf %15, %16 : vector<8x128xf32>
    %18 = math.tanh %17 : vector<8x128xf32>
    %c0_13 = arith.constant 0 : index
    %c0_14 = arith.constant 0 : index
    %19 = vector.load %arg6[%c0_13, %c0_14] : memref<8x128xf32, #tpu.memory_space<vmem>>, vector<8x128xf32>
    tpu.vector_store %arg6[%c0_13, %c0_14], %18 {strides = array<i32>} : memref<8x128xf32, #tpu.memory_space<vmem>>, vector<8x128xf32>,
    return
  }
  func.func @transform_0(%arg0: i32) -> (i32, i32) {
    %c0_i32 = arith.constant 0 : i32
    %c0_i32_0 = arith.constant 0 : i32
    return %arg0, %c0_i32 : i32, i32
  }
  func.func @transform_1(%arg0: i32) -> (i32, i32) {
    %c0_i32 = arith.constant 0 : i32
    %c0_i32_0 = arith.constant 0 : i32
    %c0_i32_1 = arith.constant 0 : i32
    return %c0_i32, %c0_i32_0 : i32, i32
  }
  func.func @transform_2(%arg0: i32) -> (i32, i32) {
    %c0_i32 = arith.constant 0 : i32
    %c0_i32_0 = arith.constant 0 : i32
    %c0_i32_1 = arith.constant 0 : i32
    return %c0_i32, %c0_i32_0 : i32, i32
  }
  func.func @transform_3(%arg0: i32) -> (i32, i32) {
    %c0_i32 = arith.constant 0 : i32
    %c0_i32_0 = arith.constant 0 : i32
    %c0_i32_1 = arith.constant 0 : i32
    return %c0_i32, %c0_i32_0 : i32, i32
  }
  func.func @transform_4(%arg0: i32) -> (i32, i32) {
    %c0_i32 = arith.constant 0 : i32
    %c0_i32_0 = arith.constant 0 : i32
    %c0_i32_1 = arith.constant 0 : i32
    return %c0_i32, %c0_i32_0 : i32, i32
  }
  func.func @transform_5(%arg0: i32) -> (i32, i32) {
    %c0_i32 = arith.constant 0 : i32
    %c0_i32_0 = arith.constant 0 : i32
    return %arg0, %c0_i32 : i32, i32
  }
}

</mosaic_0001>

<llo_original>
// kernel: tpu_custom_call.1
$region0: #{tpu_custom_call.1}
  #allocation0 [shape = 'u32[]', space=smem, size = 0x4, offset = 0x4, fixed_abs, tag = 'smem constant byte address 0x4 - core index']
  #allocation1 [shape = 'u32[72,128]{1,0:T(1,128)}', space=vmem, size = 0x9000, scoped, tag = 'internal scratch']
  %s0 = inlined_call_operand.hbm [shape: f32[8,32], index: 0, kind: input, shape index: {}]
  %s1 = inlined_call_operand.hbm [shape: f32[32,64], index: 1, kind: input, shape index: {}]
  %s2 = inlined_call_operand.hbm [shape: f32[64,128], index: 2, kind: input, shape index: {}]
  %s3 = inlined_call_operand.hbm [shape: f32[128,128], index: 3, kind: input, shape index: {}]
  %s4 = inlined_call_operand.hbm [shape: f32[3,128], index: 4, kind: input, shape index: {}]
  %s5 = inlined_call_operand.hbm [shape: f32[8,128], index: 5, kind: output, shape index: {}]
  %s6 = sld [smem:[#allocation0]]
  $region50: #{tpu_custom_call.1} parent=0
    _
  %s8 = ssub.s32 1, %s6
  %s9 = scalar_select 0, %s8, %s6
  $region1: #{tpu_custom_call.1} parent=0
    #allocation2 [shape = 'u8[4096]{0}', space=vmem, size = 0x1000, scoped, tag = 'input window, operand 0, single buffered']
    #allocation3 [shape = 's32[1]{0}', space=sflag, size = 0x4, scoped, tag = 'scoped memory for tpu_custom_call.1']
    #allocation4 [shape = 's32[1]{0}', space=sflag, size = 0x4, scoped, tag = 'scoped memory for tpu_custom_call.1']
    #allocation5 [shape = 'u8[16384]{0}', space=vmem, size = 0x4000, scoped, tag = 'input window, operand 1, single buffered']
    #allocation6 [shape = 's32[1]{0}', space=sflag, size = 0x4, scoped, tag = 'scoped memory for tpu_custom_call.1']
    #allocation7 [shape = 'u8[32768]{0}', space=vmem, size = 0x8000, scoped, tag = 'input window, operand 2, single buffered']
    #allocation8 [shape = 'u8[65536]{0}', space=vmem, size = 0x10000, scoped, tag = 'input window, operand 3, single buffered']
    #allocation9 [shape = 's32[1]{0}', space=sflag, size = 0x4, scoped, tag = 'scoped memory for tpu_custom_call.1']
    #allocation10 [shape = 'u8[2048]{0}', space=vmem, size = 0x800, scoped, tag = 'input window, operand 4, single buffered']
    #allocation11 [shape = 'u8[4096]{0}', space=vmem, size = 0x1000, scoped, tag = 'output window, operand 0, single buffered']
    %10 = vsyncpa [#allocation3], 0
    %11 = vsyncpa [#allocation6], 0
    %12 = vsyncpa [#allocation9], 0
    %13 = vsyncpa [#allocation4], 0
    // Predicated region
    $region2: #{tpu_custom_call.1} parent=1 // pred_check
      _
    $region3: #{tpu_custom_call.1} parent=1 // pred_check_branch
      %15 = sbr.rel (0) target = $region5
    $region4: #{tpu_custom_call.1} parent=1 // pred_region
      %17 = vsyncadd [#allocation3], 0
      %s19 = sshll.u32 %s0, 4
      %s20 = int_to_ptr.hbm [resolvable:$true] %s19
      %s21 = sshll.u32 [#allocation2], 4
      %s22 = int_to_ptr.vmem [resolvable:$true] %s21
      %24 = dma.hbm_to_vmem [thread:$0]  %s20, 128, %s22, [#allocation3]
    $region5: #{tpu_custom_call.1} parent=1 // pred_fallthru
      _
    // Predicated region
    $region6: #{tpu_custom_call.1} parent=1 // pred_check
      _
    $region7: #{tpu_custom_call.1} parent=1 // pred_check_branch
      %26 = sbr.rel (0) target = $region9
    $region8: #{tpu_custom_call.1} parent=1 // pred_region
      %28 = vsyncadd [#allocation6], 0
      %s29 = sshll.u32 %s1, 4
      %s30 = int_to_ptr.hbm [resolvable:$true] %s29
      %s31 = sshll.u32 [#allocation5], 4
      %s32 = int_to_ptr.vmem [resolvable:$true] %s31
      %37 = dma.hbm_to_vmem [thread:$0]  %s30, 512, %s32, [#allocation6], 128, 128, 8
    $region9: #{tpu_custom_call.1} parent=1 // pred_fallthru
      _
    // Predicated region
    $region10: #{tpu_custom_call.1} parent=1 // pred_check
      _
    $region11: #{tpu_custom_call.1} parent=1 // pred_check_branch
      %39 = sbr.rel (0) target = $region13
    $region12: #{tpu_custom_call.1} parent=1 // pred_region
      %41 = vsyncadd [#allocation6], 0
      %s42 = sshll.u32 %s2, 4
      %s43 = int_to_ptr.hbm [resolvable:$true] %s42
      %s44 = sshll.u32 [#allocation7], 4
      %s45 = int_to_ptr.vmem [resolvable:$true] %s44
      %50 = dma.hbm_to_vmem [thread:$0]  %s43, 1024, %s45, [#allocation6], 128, 128, 8
    $region13: #{tpu_custom_call.1} parent=1 // pred_fallthru
      _
    // Predicated region
    $region14: #{tpu_custom_call.1} parent=1 // pred_check
      _
    $region15: #{tpu_custom_call.1} parent=1 // pred_check_branch
      %52 = sbr.rel (0) target = $region17
    $region16: #{tpu_custom_call.1} parent=1 // pred_region
      %54 = vsyncadd [#allocation9], 0
      %s55 = sshll.u32 %s3, 4
      %s56 = int_to_ptr.hbm [resolvable:$true] %s55
      %s57 = sshll.u32 [#allocation8], 4
      %s58 = int_to_ptr.vmem [resolvable:$true] %s57
      %63 = dma.hbm_to_vmem [thread:$0]  %s56, 2048, %s58, [#allocation9], 128, 128, 8
    $region17: #{tpu_custom_call.1} parent=1 // pred_fallthru
      _
    // Predicated region
    $region18: #{tpu_custom_call.1} parent=1 // pred_check
      _
    $region19: #{tpu_custom_call.1} parent=1 // pred_check_branch
      %65 = sbr.rel (0) target = $region21
    $region20: #{tpu_custom_call.1} parent=1 // pred_region
      %67 = vsyncadd [#allocation9], 0
      %s69 = sshll.u32 %s4, 4
      %s70 = int_to_ptr.hbm [resolvable:$true] %s69
      %s71 = sshll.u32 [#allocation10], 4
      %s72 = int_to_ptr.vmem [resolvable:$true] %s71
      %74 = dma.hbm_to_vmem [thread:$0]  %s70, 64, %s72, [#allocation9]
    $region21: #{tpu_custom_call.1} parent=1 // pred_fallthru
      _
    // Predicated region
    $region22: #{tpu_custom_call.1} parent=1 // pred_check
      _
    $region23: #{tpu_custom_call.1} parent=1 // pred_check_branch
      %76 = sbr.rel (0) target = $region25
    $region24: #{tpu_custom_call.1} parent=1 // pred_region
      %78 = dma.done [#allocation3], 128
    $region25: #{tpu_custom_call.1} parent=1 // pred_fallthru
      _
    // Predicated region
    $region26: #{tpu_custom_call.1} parent=1 // pred_check
      _
    $region27: #{tpu_custom_call.1} parent=1 // pred_check_branch
      %80 = sbr.rel (0) target = $region29
    $region28: #{tpu_custom_call.1} parent=1 // pred_region
      %82 = dma.done [#allocation6], 512
    $region29: #{tpu_custom_call.1} parent=1 // pred_fallthru
      _
    // Predicated region
    $region30: #{tpu_custom_call.1} parent=1 // pred_check
      _
    $region31: #{tpu_custom_call.1} parent=1 // pred_check_branch
      %84 = sbr.rel (0) target = $region33
    $region32: #{tpu_custom_call.1} parent=1 // pred_region
      %86 = dma.done [#allocation6], 1024
    $region33: #{tpu_custom_call.1} parent=1 // pred_fallthru
      _
    // Predicated region
    $region34: #{tpu_custom_call.1} parent=1 // pred_check
      _
    $region35: #{tpu_custom_call.1} parent=1 // pred_check_branch
      %88 = sbr.rel (0) target = $region37
    $region36: #{tpu_custom_call.1} parent=1 // pred_region
      %90 = dma.done [#allocation9], 2048
    $region37: #{tpu_custom_call.1} parent=1 // pred_fallthru
      _
    // Predicated region
    $region38: #{tpu_custom_call.1} parent=1 // pred_check
      _
    $region39: #{tpu_custom_call.1} parent=1 // pred_check_branch
      %92 = sbr.rel (0) target = $region41
    $region40: #{tpu_custom_call.1} parent=1 // pred_region
      %94 = dma.done [#allocation9], 64
    $region41: #{tpu_custom_call.1} parent=1 // pred_fallthru
      _
    %v95 = vld [vmem:[#allocation2] sm:$0xff]
    %v96 = vld [vmem:[#allocation5] sm:$0xff]
    %v97 = vld [vmem:[#allocation5 + $0x8] sm:$0xff]
    %v98 = vld [vmem:[#allocation5 + $0x10] sm:$0xff]
    %v99 = vld [vmem:[#allocation5 + $0x18] sm:$0xff]
    %v100 = vld [vmem:[#allocation10] sm:$0x1]
    %v101 = vperm.slane %v100, 0
    %vm102 = vcmask 261120
    %v104 = vsel %vm102, %v95, 0
    %106 = vmatpush.msra.mxu0 0.0
    %107 = vmatpush.msra.mxu0 0.0
    %108 = vmatpush.msra.mxu0 0.0
    %109 = vmatpush.msra.mxu0 0.0
    %110 = vmatpush.msra.mxu0 0.0
    %111 = vmatpush.msra.mxu0 0.0
    %112 = vmatpush.msra.mxu0 0.0
    %113 = vmatpush.msra.mxu0 0.0
    %114 = vmatpush.msra.mxu0 0.0
    %115 = vmatpush.msra.mxu0 0.0
    %116 = vmatpush.msra.mxu0 0.0
    %117 = vmatpush.msra.mxu0 0.0
    %118 = vmatpush.msra.mxu0 %v99
    %119 = vmatpush.msra.mxu0 %v98
    %120 = vmatpush.msra.mxu0 %v97
    %121 = vmatpush.msra.mxu0 %v96
    %122 = vmatmul.f32.gmra.mxu0 %v104
    %v123 = vpop.f32.mrf.mxu0
    %v124 = vadd.f32 %v101, %v123
    %125 = vdwg.mxu0
    %v126 = vtanh.pop %v124
    %v127 = vld [vmem:[#allocation7] sm:$0xff]
    %v128 = vld [vmem:[#allocation7 + $0x8] sm:$0xff]
    %v129 = vld [vmem:[#allocation7 + $0x10] sm:$0xff]
    %v130 = vld [vmem:[#allocation7 + $0x18] sm:$0xff]
    %v131 = vld [vmem:[#allocation7 + $0x20] sm:$0xff]
    %v132 = vld [vmem:[#allocation7 + $0x28] sm:$0xff]
    %v133 = vld [vmem:[#allocation7 + $0x30] sm:$0xff]
    %v134 = vld [vmem:[#allocation7 + $0x38] sm:$0xff]
    %v135 = vld [vmem:[#allocation10 + $0x1] sm:$0x1]
    %v136 = vperm.slane %v135, 0
    %vm137 = vcmask 523264
    %v139 = vsel %vm137, %v126, 0
    %141 = vmatpush.msra.mxu0 0.0
    %142 = vmatpush.msra.mxu0 0.0
    %143 = vmatpush.msra.mxu0 0.0
    %144 = vmatpush.msra.mxu0 0.0
    %145 = vmatpush.msra.mxu0 0.0
    %146 = vmatpush.msra.mxu0 0.0
    %147 = vmatpush.msra.mxu0 0.0
    %148 = vmatpush.msra.mxu0 0.0
    %149 = vmatpush.msra.mxu0 %v134
    %150 = vmatpush.msra.mxu0 %v133
    %151 = vmatpush.msra.mxu0 %v132
    %152 = vmatpush.msra.mxu0 %v131
    %153 = vmatpush.msra.mxu0 %v130
    %154 = vmatpush.msra.mxu0 %v129
    %155 = vmatpush.msra.mxu0 %v128
    %156 = vmatpush.msra.mxu0 %v127
    %157 = vmatmul.f32.gmra.mxu0 %v139
    %v158 = vpop.f32.mrf.mxu0
    %v159 = vadd.f32 %v136, %v158
    %160 = vdwg.mxu0
    %v161 = vtanh.pop %v159
    %v162 = vld [vmem:[#allocation8] sm:$0xff]
    %v163 = vld [vmem:[#allocation8 + $0x8] sm:$0xff]
    %v164 = vld [vmem:[#allocation8 + $0x10] sm:$0xff]
    %v165 = vld [vmem:[#allocation8 + $0x18] sm:$0xff]
    %v166 = vld [vmem:[#allocation8 + $0x20] sm:$0xff]
    %v167 = vld [vmem:[#allocation8 + $0x28] sm:$0xff]
    %v168 = vld [vmem:[#allocation8 + $0x30] sm:$0xff]
    %v169 = vld [vmem:[#allocation8 + $0x38] sm:$0xff]
    %v170 = vld [vmem:[#allocation8 + $0x40] sm:$0xff]
    %v171 = vld [vmem:[#allocation8 + $0x48] sm:$0xff]
    %v172 = vld [vmem:[#allocation8 + $0x50] sm:$0xff]
    %v173 = vld [vmem:[#allocation8 + $0x58] sm:$0xff]
    %v174 = vld [vmem:[#allocation8 + $0x60] sm:$0xff]
    %v175 = vld [vmem:[#allocation8 + $0x68] sm:$0xff]
    %v176 = vld [vmem:[#allocation8 + $0x70] sm:$0xff]
    %v177 = vld [vmem:[#allocation8 + $0x78] sm:$0xff]
    %v178 = vld [vmem:[#allocation10 + $0x2] sm:$0x1]
    %v179 = vperm.slane %v178, 0
    %180 = vmatpush.msra.mxu0 %v177
    %181 = vmatpush.msra.mxu0 %v176
    %182 = vmatpush.msra.mxu0 %v175
    %183 = vmatpush.msra.mxu0 %v174
    %184 = vmatpush.msra.mxu0 %v173
    %185 = vmatpush.msra.mxu0 %v172
    %186 = vmatpush.msra.mxu0 %v171
    %187 = vmatpush.msra.mxu0 %v170
    %188 = vmatpush.msra.mxu0 %v169
    %189 = vmatpush.msra.mxu0 %v168
    %190 = vmatpush.msra.mxu0 %v167
    %191 = vmatpush.msra.mxu0 %v166
    %192 = vmatpush.msra.mxu0 %v165
    %193 = vmatpush.msra.mxu0 %v164
    %194 = vmatpush.msra.mxu0 %v163
    %195 = vmatpush.msra.mxu0 %v162
    %196 = vmatmul.f32.gmra.mxu0 %v161
    %v197 = vpop.f32.mrf.mxu0
    %v198 = vadd.f32 %v179, %v197
    %199 = vdwg.mxu0
    %v200 = vtanh.pop %v198
    %201 = vst [vmem:[#allocation11] sm:$0xff] %v200
    // Predicated region
    $region42: #{tpu_custom_call.1} parent=1 // pred_check
      _
    $region43: #{tpu_custom_call.1} parent=1 // pred_check_branch
      %203 = sbr.rel (0) target = $region45
    $region44: #{tpu_custom_call.1} parent=1 // pred_region
      %205 = vsyncadd [#allocation4], 0
      %s207 = sshll.u32 [#allocation11], 4
      %s208 = int_to_ptr.vmem [resolvable:$true] %s207
      %s209 = sshll.u32 %s5, 4
      %s210 = int_to_ptr.hbm [resolvable:$true] %s209
      %212 = dma.vmem_to_hbm [thread:$0]  %s208, 128, %s210, [#allocation4]
    $region45: #{tpu_custom_call.1} parent=1 // pred_fallthru
      _
    // Predicated region
    $region46: #{tpu_custom_call.1} parent=1 // pred_check
      _
    $region47: #{tpu_custom_call.1} parent=1 // pred_check_branch
      %214 = sbr.rel (0) target = $region49
    $region48: #{tpu_custom_call.1} parent=1 // pred_region
      %216 = dma.done [#allocation4], 128
    $region49: #{tpu_custom_call.1} parent=1 // pred_fallthru
      _
    %217 = vsyncpa [#allocation3], 1
    %218 = vsyncpa [#allocation6], 1
    %219 = vsyncpa [#allocation9], 1
    %220 = vsyncpa [#allocation4], 1

</llo_original>
